<compile_context>
chip_gen: v6e
topology: v6e:2x2x1
jax: 0.10.0
libtpu: 0.0.40
codegen_flags: <defaults>
</compile_context>

<pallas_src>
import functools

import jax
import jax.numpy as jnp
from jax import lax
from jax.experimental import pallas as pl
from jax.experimental.pallas import tpu as pltpu


_MXU_MIN_K = 16  # below this (and stride == 1) the VPU shifted-window path wins


# --------------------------------------------------------------------------------------
# Kernels
# --------------------------------------------------------------------------------------

def _moving_avg_vpu_kernel(x_ref, o_ref, *, K, TO):
    """stride == 1, small K: direct shifted-window accumulation on the VPU.

    x_ref : (LP, TN) edge-replicated padded input column strip (resident across row tiles)
    o_ref : (TO, TN) output row tile (lane-dense)
    """
    j = pl.program_id(1)
    r0 = pl.multiple_of(j * TO, TO)
    acc = x_ref[pl.ds(r0, TO), :].astype(jnp.float32)
    for k in range(1, K):                              # K < 16: static unroll is fine
        acc = acc + x_ref[pl.ds(r0 + k, TO), :].astype(jnp.float32)
    o_ref[...] = (acc * (1.0 / K)).astype(o_ref.dtype)


def _moving_avg_band_kernel(x_ref, o_ref, band_ref, *, K, S, TO, TIP):
    """large K and/or stride > 1: banded 0/1 matrix on the MXU.

    band[t, r] = 1 iff (r - t*S) in [0, K); built once per column strip into VMEM scratch.
    out = (band @ window) * (1/K), accumulated in f32 by the MXU; no strided sublane loads.
    """
    j = pl.program_id(1)

    @pl.when(j == 0)
    def _():
        t_idx = lax.broadcasted_iota(jnp.int32, (TO, TIP), 0)
        r_idx = lax.broadcasted_iota(jnp.int32, (TO, TIP), 1)
        d = r_idx - t_idx * S
        band_ref[...] = jnp.where(
            jnp.logical_and(d >= 0, d < K), 1.0, 0.0).astype(band_ref.dtype)

    r0 = pl.multiple_of(j * (TO * S), TO * S)
    win = x_ref[pl.ds(r0, TIP), :]                     # one contiguous window read
    acc = jnp.dot(band_ref[...], win, preferred_element_type=jnp.float32)
    o_ref[...] = (acc * (1.0 / K)).astype(o_ref.dtype)


# --------------------------------------------------------------------------------------
# Tile / VMEM planning
# --------------------------------------------------------------------------------------

def _round_up(x, m):
    return ((x + m - 1) // m) * m


def _vmem_capacity_bytes():
    """Physical per-core VMEM; falls back to the smallest current generation (v7x, 64 MiB)."""
    try:
        return int(pltpu.get_tpu_info().vmem_capacity_bytes)
    except Exception:
        return 64 * 1024 * 1024


def _plan_tiles(n_out, N, K, S, itemsize, use_band, band_itemsize,
                row_tile=None, lane_tile=None):
    """Pick (row tile TO, lane tile TN, padded length LP) and a vmem limit from the chip."""
    cap = _vmem_capacity_bytes()
    budget = max(8 << 20, min(int(cap * 0.7), cap - (4 << 20)))
    sub = max(8, 32 // max(itemsize, 1))      # sublane packing: 8 (f32), 16 (bf16), 32 (i8)

    def need_bytes(TO, TN):
        NJ = -(-n_out // TO)
        LP = (NJ * TO - 1) * S + K            # padded rows so every tile's window is in-bounds
        TIP = (TO - 1) * S + K
        lane = _round_up(TN, 128)             # account lane padding of every VMEM buffer
        b = 2 * _round_up(LP, sub) * lane * itemsize    # resident input strip (double-buffered)
        b += 2 * _round_up(TO, sub) * lane * itemsize   # output tile (double-buffered)
        b += _round_up(TO, 8) * lane * 4                # f32 accumulator temporaries
        if use_band:
            b += _round_up(TO, sub) * _round_up(TIP, 128) * band_itemsize  # band scratch
            b += _round_up(TIP, sub) * lane * itemsize                     # window operand
        return b, NJ, LP

    if lane_tile is not None:
        tn_cands = [min(int(lane_tile), N)]   # if < N it must be a multiple of 128
    elif N <= 512:
        tn_cands = [N]
    else:
        tn_cands = [512, 256, 128]

    if row_tile is not None:
        to_base = [int(row_tile)]             # if < n_out it must be a multiple of 8
    elif use_band:
        # MXU work per output row grows with TO*S (the band is mostly zeros): keep it moderate.
        to_base = [512, 256, 128, 64, 32]
    else:
        to_base = [2048, 1024, 512, 256, 128, 64, 32]
    to_cands = []
    for t in to_base:
        t = min(t, n_out)
        if t not in to_cands:
            to_cands.append(t)

    fits, fallback = [], None
    for TN in tn_cands:
        for TO in to_cands:
            b, NJ, LP = need_bytes(TO, TN)
            if fallback is None or b < fallback[0]:
                fallback = (b, TO, TN, NJ, LP)
            if b <= budget:
                fits.append((TO * TN, TO, TN, b, NJ, LP))
    if fits:
        _, TO, TN, need, NJ, LP = max(fits)   # biggest tile that fits -> best overhead amortization
    else:
        # TODO(synk): pathological L -- needs the manual-DMA haloed row tiling noted above.
        need, TO, TN, NJ, LP = fallback
    vmem_limit = min(max(32 << 20, need + (8 << 20)), cap - (1 << 20))
    return TO, TN, NJ, LP, int(vmem_limit)


# --------------------------------------------------------------------------------------
# Wrapper
# --------------------------------------------------------------------------------------

def moving_avg(x, kernel_size, stride, *, row_tile=None, lane_tile=None):
    """Equivalent of MovingAvg.forward for x of shape (B, L, C)."""
    B, L, C = x.shape
    K = int(kernel_size)
    S = int(stride)
    assert K >= 1 and S >= 1
    N = B * C
    n_out = (L - 1) // S + 1          # AvgPool1d output length on the edge-padded sequence
    pad_front = (K - 1) // 2          # matches the torch module exactly: front=(K-1)//2, end=K//2

    use_band = (K >= _MXU_MIN_K) or (S > 1)
    isz = jnp.dtype(x.dtype).itemsize
    band_dtype = jnp.float32 if x.dtype == jnp.float32 else x.dtype  # 0/1 band is exact either way
    band_isz = jnp.dtype(band_dtype).itemsize

    TO, TN, NJ, LP, vmem_limit = _plan_tiles(
        n_out, N, K, S, isz, use_band, band_isz, row_tile=row_tile, lane_tile=lane_tile)
    NC = -(-N // TN)
    TIP = (TO - 1) * S + K

    # Lane-dense layout: (B, L, C) -> (L, B*C), with the edge-replication padding (and the few
    # extra replicated rows that round the last row tile up) fused into the same relayout pass.
    xt = jnp.transpose(x, (1, 0, 2)).reshape(L, N)
    back_rows = max(LP - pad_front - L, 0)
    parts = []
    if pad_front > 0:
        parts.append(jnp.broadcast_to(xt[0:1], (pad_front, N)))
    parts.append(xt)
    if back_rows > 0:
        parts.append(jnp.broadcast_to(xt[L - 1:L], (back_rows, N)))
    xpt = (jnp.concatenate(parts, axis=0) if len(parts) > 1 else xt)[:LP]

    if use_band:
        kern = functools.partial(_moving_avg_band_kernel, K=K, S=S, TO=TO, TIP=TIP)
        scratch = [pltpu.VMEM((TO, TIP), band_dtype)]
    else:
        kern = functools.partial(_moving_avg_vpu_kernel, K=K, TO=TO)
        scratch = []

    ot = pl.pallas_call(
        kern,
        out_shape=jax.ShapeDtypeStruct((n_out, N), x.dtype),
        grid_spec=pltpu.PrefetchScalarGridSpec(
            num_scalar_prefetch=0,
            grid=(NC, NJ),
            in_specs=[
                # Whole padded column strip; its block index only depends on the lane-tile axis,
                # so it is fetched from HBM once per strip and reused for every row tile.
                pl.BlockSpec((LP, TN), lambda c, j: (0, c)),
            ],
            out_specs=pl.BlockSpec((TO, TN), lambda c, j: (j, c)),
            scratch_shapes=scratch,
        ),
        compiler_params=pltpu.CompilerParams(
            # Megacore shards the lane axis (independent columns -> no duplicated input DMA);
            # the row-tile axis stays sequential so the resident strip is reused.
            dimension_semantics=("parallel", "arbitrary"),
            vmem_limit_bytes=vmem_limit,
        ),
    )(xpt)

    # (n_out, B*C) -> (B, n_out, C)
    return jnp.transpose(ot.reshape(n_out, B, C), (1, 0, 2))


# --------------------------------------------------------------------------------------
# Pure-JAX reference (mirrors the PyTorch forward) + self-test
# --------------------------------------------------------------------------------------

def _ref_moving_avg(x, kernel_size, stride):
    K = int(kernel_size)
    S = int(stride)
    B, L, C = x.shape
    front = jnp.repeat(x[:, 0:1, :], (K - 1) // 2, axis=1)
    end = jnp.repeat(x[:, -1:, :], K // 2, axis=1)
    xp = jnp.concatenate([front, x, end], axis=1)
    n_out = (L - 1) // S + 1
    acc = jnp.zeros((B, n_out, C), jnp.float32)
    for k in range(K):
        acc = acc + xp[:, k:k + (n_out - 1) * S + 1:S, :].astype(jnp.float32)
    return (acc / K).astype(x.dtype)


if __name__ == "__main__":
    key = jax.random.PRNGKey(0)
    # (B, L, C, kernel_size, stride, row_tile, lane_tile, atol)
    # The MXU-band configs use a looser tolerance: the 0/1 band keeps products exact, but f32
    # matmuls may run with reduced-precision MXU passes on some generations / compiler defaults
    # (typically they agree to ~1e-6 anyway).
    configs = [
        (2, 16, 8, 5, 1, None, None, 1e-5),    # tiny, VPU path, single tile
        (2, 16, 8, 4, 1, None, None, 1e-5),    # even K: asymmetric padding (front 1, end 2)
        (2, 33, 8, 1, 1, None, None, 1e-5),    # K == 1 degenerate
        (2, 1500, 8, 5, 1, 128, None, 1e-5),   # VPU path, several row tiles + partial last tile
        (4, 600, 96, 25, 1, 128, 128, 2e-3),   # MXU band path, multiple column + row tiles
        (2, 257, 8, 25, 2, 64, None, 2e-3),    # MXU band path with stride 2
    ]
    for (B, L, C, K, S, rt, lt, tol) in configs:
        key, sub = jax.random.split(key)
        x = jax.random.normal(sub, (B, L, C), dtype=jnp.float32)
        out = jax.block_until_ready(moving_avg(x, K, S, row_tile=rt, lane_tile=lt))
        ref = _ref_moving_avg(x, K, S)
        assert out.shape == ref.shape, (out.shape, ref.shape)
        err = float(jnp.max(jnp.abs(out.astype(jnp.float32) - ref.astype(jnp.float32))))
        assert err <= tol, ((B, L, C, K, S), err)
    print("KERNEL_OK")
</pallas_src>

<mosaic_0001>
module attributes {stable_mosaic.version = 11 : i64} {
  func.func @_moving_avg_vpu_kernel(%arg0: i32, %arg1: i32, %arg2: memref<20x16xf32, #tpu.memory_space<vmem>>, %arg3: memref<16x16xf32, #tpu.memory_space<vmem>>) attributes {dimension_semantics = [#tpu.dimension_semantics<parallel>, #tpu.dimension_semantics<arbitrary>], iteration_bounds = array<i64: 1, 1>, scalar_prefetch = 0 : i64, scratch_operands = 0 : i64, tpu.core_type = #tpu.core_type<tc>, window_params = [{transform_indices = @transform_0, window_bounds = array<i64: 20, 16>}, {transform_indices = @transform_1, window_bounds = array<i64: 16, 16>}]} {
    %c16_i32 = arith.constant 16 : i32
    %0 = arith.muli %arg1, %c16_i32 : i32
    %1 = tpu.assume_multiple %0, 16 : i32
    %2 = arith.index_cast %1 : i32 to index
    %c0 = arith.constant 0 : index
    %3 = vector.load %arg2[%2, %c0] : memref<20x16xf32, #tpu.memory_space<vmem>>, vector<16x16xf32>
    %c1_i32 = arith.constant 1 : i32
    %4 = arith.addi %1, %c1_i32 : i32
    %5 = arith.index_cast %4 : i32 to index
    %c0_0 = arith.constant 0 : index
    %6 = vector.load %arg2[%5, %c0_0] : memref<20x16xf32, #tpu.memory_space<vmem>>, vector<16x16xf32>
    %7 = arith.addf %3, %6 : vector<16x16xf32>
    %c2_i32 = arith.constant 2 : i32
    %8 = arith.addi %1, %c2_i32 : i32
    %9 = arith.index_cast %8 : i32 to index
    %c0_1 = arith.constant 0 : index
    %10 = vector.load %arg2[%9, %c0_1] : memref<20x16xf32, #tpu.memory_space<vmem>>, vector<16x16xf32>
    %11 = arith.addf %7, %10 : vector<16x16xf32>
    %c3_i32 = arith.constant 3 : i32
    %12 = arith.addi %1, %c3_i32 : i32
    %13 = arith.index_cast %12 : i32 to index
    %c0_2 = arith.constant 0 : index
    %14 = vector.load %arg2[%13, %c0_2] : memref<20x16xf32, #tpu.memory_space<vmem>>, vector<16x16xf32>
    %15 = arith.addf %11, %14 : vector<16x16xf32>
    %c4_i32 = arith.constant 4 : i32
    %16 = arith.addi %1, %c4_i32 : i32
    %17 = arith.index_cast %16 : i32 to index
    %c0_3 = arith.constant 0 : index
    %18 = vector.load %arg2[%17, %c0_3] : memref<20x16xf32, #tpu.memory_space<vmem>>, vector<16x16xf32>
    %19 = arith.addf %15, %18 : vector<16x16xf32>
    %cst = arith.constant 2.000000e-01 : f32
    %20 = vector.broadcast %cst : f32 to vector<16x16xf32>
    %21 = arith.mulf %19, %20 : vector<16x16xf32>
    %c0_4 = arith.constant 0 : index
    %c0_5 = arith.constant 0 : index
    %22 = vector.load %arg3[%c0_4, %c0_5] : memref<16x16xf32, #tpu.memory_space<vmem>>, vector<16x16xf32>
    tpu.vector_store %arg3[%c0_4, %c0_5], %21 {strides = array<i32>} : memref<16x16xf32, #tpu.memory_space<vmem>>, vector<16x16xf32>,
    return
  }
  func.func @transform_0(%arg0: i32, %arg1: i32) -> (i32, i32) {
    %c0_i32 = arith.constant 0 : i32
    %c0_i32_0 = arith.constant 0 : i32
    return %c0_i32, %arg0 : i32, i32
  }
  func.func @transform_1(%arg0: i32, %arg1: i32) -> (i32, i32) {
    %c0_i32 = arith.constant 0 : i32
    return %arg1, %arg0 : i32, i32
  }
}

</mosaic_0001>

<llo_original>
// kernel: tpu_custom_call.1
$region0: #{tpu_custom_call.1}
  #allocation0 [shape = 'u32[]', space=smem, size = 0x4, offset = 0x4, fixed_abs, tag = 'smem constant byte address 0x4 - core index']
  #allocation1 [shape = 'u32[144,128]{1,0:T(1,128)}', space=vmem, size = 0x12000, scoped, tag = 'internal scratch']
  %s0 = inlined_call_operand.vmem [shape: f32[20,16], index: 0, kind: input, shape index: {}]
  %s1 = inlined_call_operand.hbm [shape: f32[16,16], index: 1, kind: output, shape index: {}]
  %s2 = sld [smem:[#allocation0]]
  $region14: #{tpu_custom_call.1} parent=0
    _
  %s4 = ssub.s32 1, %s2
  %s5 = scalar_select 0, %s4, %s2
  $region1: #{tpu_custom_call.1} parent=0
    #allocation2 [shape = 'u8[8192]{0}', space=vmem, size = 0x2000, scoped, tag = 'output window, operand 0, single buffered']
    #allocation3 [shape = 's32[1]{0}', space=sflag, size = 0x4, scoped, tag = 'scoped memory for tpu_custom_call.1']
    %6 = vsyncpa [#allocation3], 0
    // Predicated region
    $region2: #{tpu_custom_call.1} parent=1 // pred_check
      _
    $region3: #{tpu_custom_call.1} parent=1 // pred_check_branch
      %8 = sbr.rel (0) target = $region5
    $region4: #{tpu_custom_call.1} parent=1 // pred_region
      _
    $region5: #{tpu_custom_call.1} parent=1 // pred_fallthru
      _
    %s9 = smul.u32 0, 16
    %s10 = scalar_lea.vmem %s0, %s9
    %v11 = vld [vmem:[%s10] sm:$0xff]
    %v12 = vld [vmem:[%s10 + $0x8] sm:$0xff]
    %s13 = sadd.s32 %s9, 1
    %s14 = scalar_lea.vmem %s0, %s13
    %v15 = vld [vmem:[%s14] sm:$0xff]
    %v16 = vld [vmem:[%s14 + $0x8] sm:$0xff]
    %v17 = vadd.f32 %v11, %v15
    %v18 = vadd.f32 %v12, %v16
    %s19 = sadd.s32 %s9, 2
    %s20 = scalar_lea.vmem %s0, %s19
    %v21 = vld [vmem:[%s20] sm:$0xff]
    %v22 = vld [vmem:[%s20 + $0x8] sm:$0xff]
    %v23 = vadd.f32 %v17, %v21
    %v24 = vadd.f32 %v18, %v22
    %s25 = sadd.s32 %s9, 3
    %s26 = scalar_lea.vmem %s0, %s25
    %v27 = vld [vmem:[%s26] sm:$0xff]
    %v28 = vld [vmem:[%s26 + $0x8] sm:$0xff]
    %v29 = vadd.f32 %v23, %v27
    %v30 = vadd.f32 %v24, %v28
    %s31 = sadd.s32 %s9, 4
    %s32 = scalar_lea.vmem %s0, %s31
    %v33 = vld [vmem:[%s32] sm:$0xff]
    %v34 = vld [vmem:[%s32 + $0x8] sm:$0xff]
    %v35 = vadd.f32 %v29, %v33
    %v36 = vadd.f32 %v30, %v34
    %v37 = vmul.f32 %v35, 0.2
    %v38 = vmul.f32 %v36, 0.2
    %vm39 = vcmask 130048
    %40 = vst.msk [vmem:[#allocation2] sm:$0xff] %vm39, %v37
    %41 = vst.msk [vmem:[#allocation2 + $0x8] sm:$0xff] %vm39, %v38
    // Predicated region
    $region6: #{tpu_custom_call.1} parent=1 // pred_check
      _
    $region7: #{tpu_custom_call.1} parent=1 // pred_check_branch
      %43 = sbr.rel (0) target = $region9
    $region8: #{tpu_custom_call.1} parent=1 // pred_region
      %s45 = ssub.s32 256, 256
      %46 = vsyncadd [#allocation3], %s45
      %s47 = sshll.u32 [#allocation2], 4
      %s48 = int_to_ptr.vmem [resolvable:$true] %s47
      %53 = dma.vmem_to_hbm [thread:$0]  %s48, 256, %s1, [#allocation3], 128, 128, 8
    $region9: #{tpu_custom_call.1} parent=1 // pred_fallthru
      _
    // Predicated region
    $region10: #{tpu_custom_call.1} parent=1 // pred_check
      _
    $region11: #{tpu_custom_call.1} parent=1 // pred_check_branch
      %55 = sbr.rel (0) target = $region13
    $region12: #{tpu_custom_call.1} parent=1 // pred_region
      %56 = dma.done [#allocation3], 256
    $region13: #{tpu_custom_call.1} parent=1 // pred_fallthru
      _
    %57 = vsyncpa [#allocation3], 1

</llo_original>
